<compile_context>
chip_gen: v7x
topology: tpu7x:2x2x1
jax: 0.10.0
libtpu: 0.0.40
codegen_flags: <defaults>
</compile_context>

<pallas_src>
import jax
import jax.numpy as jnp
from jax.experimental import pallas as pl
from jax.experimental.pallas import tpu as pltpu

_COL_CANDIDATES = (512, 256, 128)   # lane-dense last dims (multiples of 128)
_PAD_COLS = 512                     # fallback slab width when padding is unavoidable


def _round_up(a: int, b: int) -> int:
    return ((a + b - 1) // b) * b


def _device_kind() -> str:
    try:
        return jax.devices()[0].device_kind.lower()
    except Exception:
        return ""


def _is_v7(kind: str) -> bool:
    return ("v7" in kind) or ("7x" in kind)


def _sublane_multiple(dtype) -> int:
    # Packed sublane tile: 8 for 32-bit, 16 for 16-bit, 32 for 8-bit dtypes.
    itemsize = jnp.dtype(dtype).itemsize
    return max(8, 32 // max(itemsize, 1))


def _target_block_bytes(kind: str) -> int:
    if _is_v7(kind):
        # 3.2 TB/s HBM: bigger steps amortize the ~0.35us/step fixed cost.
        # in+out double-buffered at 4 MiB = 16 MiB, fits v7x's 32 MiB scoped VMEM.
        return 4 * 1024 * 1024
    # v5e/v6e: 2 MiB/buffer -> 8 MiB double-buffered, under v5e's 16 MiB default.
    return 2 * 1024 * 1024


def _tlu_kernel(thr_ref, x_ref, o_ref):
    # thr_ref: (1,) float32 scalar in SMEM (scalar prefetch).
    # x_ref/o_ref: (tm, cols) VMEM tiles. Pure VPU elementwise clamp.
    x = x_ref[...]
    thr = thr_ref[0].astype(x.dtype)
    o_ref[...] = jnp.minimum(jnp.maximum(x, -thr), thr)


def tlu(x, threshold, *, inplace: bool = False):
    """clamp(x, -threshold, +threshold) via a tiled, pipelined Pallas kernel.

    Any-rank input, same shape/dtype out. `threshold` may be a Python or JAX
    scalar (runtime value; no recompile per threshold). Set `inplace=True` only
    if the caller donates `x` (e.g. under jit with donate_argnums); it aliases
    the input HBM buffer to the output (input_output_aliases) to halve peak
    HBM footprint.
    """
    orig_shape = x.shape
    orig_dtype = x.dtype

    total = 1
    for d in orig_shape:
        total *= d
    if total == 0:
        return x

    kind = _device_kind()
    itemsize = jnp.dtype(orig_dtype).itemsize
    sublane = _sublane_multiple(orig_dtype)
    num_cores = 2 if _is_v7(kind) else 1

    # ---- Layout: exact lane-dense reshape whenever a 128-multiple factor exists.
    cols = None
    for c in _COL_CANDIDATES:
        if total % c == 0:
            cols = c
            break
    padded = cols is None
    if padded:
        cols = _PAD_COLS
        rows = pl.cdiv(total, cols)
        flat = jnp.pad(x.reshape(-1), (0, rows * cols - total))
        x2d = flat.reshape(rows, cols)
    else:
        rows = total // cols
        x2d = x.reshape(rows, cols)

    # ---- Block-row count (tm): dtype- and generation-aware, sublane-aligned.
    bytes_per_row = cols * itemsize
    max_rows = max(
        sublane,
        (_target_block_bytes(kind) // bytes_per_row) // sublane * sublane,
    )

    if rows <= max_rows:
        if num_cores >= 2 and rows >= 2 * sublane:
            # v7x: guarantee >= 2 blocks so the "parallel" axis feeds both cores.
            tm = _round_up(pl.cdiv(rows, 2), sublane)
        else:
            # Full-extent block: legal even if rows isn't sublane-aligned.
            tm = rows
    else:
        tm = max_rows

    grid = (pl.cdiv(rows, tm),)  # ragged final block is masked by Pallas

    thr_arr = jnp.asarray(threshold, dtype=jnp.float32).reshape(1)

    # Alias the (index-1) tensor input onto output 0 only when requested and the
    # no-padding path was taken (padded temps aren't donated in eager anyway).
    aliases = {1: 0} if (inplace and not padded) else {}

    out2d = pl.pallas_call(
        _tlu_kernel,
        out_shape=jax.ShapeDtypeStruct((rows, cols), orig_dtype),
        grid_spec=pltpu.PrefetchScalarGridSpec(
            num_scalar_prefetch=1,
            grid=grid,
            in_specs=[pl.BlockSpec((tm, cols), lambda i, thr: (i, 0))],
            out_specs=pl.BlockSpec((tm, cols), lambda i, thr: (i, 0)),
        ),
        compiler_params=pltpu.CompilerParams(
            dimension_semantics=("parallel",),
            # Explicit scoped-VMEM limit: safe on every generation (<= physical
            # VMEM everywhere) and gives headroom for the 4 MiB v7x blocks.
            vmem_limit_bytes=32 * 1024 * 1024,
        ),
        input_output_aliases=aliases,
    )(thr_arr, x2d)

    if padded:
        return out2d.reshape(-1)[:total].reshape(orig_shape)
    return out2d.reshape(orig_shape)


if __name__ == "__main__":
    threshold = 1.0

    # Primary NCHW conv-activation case (exact lane-dense reshape, no padding).
    x = jax.random.normal(jax.random.PRNGKey(0), (2, 4, 16, 16), dtype=jnp.float32) * 3.0
    out = jax.block_until_ready(tlu(x, threshold))
    ref = jnp.clip(x, -threshold, threshold)
    assert out.shape == x.shape and out.dtype == x.dtype
    assert jnp.allclose(out, ref), "mismatch vs reference clamp (f32)"

    # bf16 case (exercises the 16-sublane packed-dtype tiling path).
    xb = (jax.random.normal(jax.random.PRNGKey(1), (2, 8, 32, 32), dtype=jnp.float32) * 3.0
          ).astype(jnp.bfloat16)
    outb = jax.block_until_ready(tlu(xb, threshold))
    refb = jnp.clip(xb, -threshold, threshold).astype(jnp.bfloat16)
    assert outb.dtype == xb.dtype
    assert jnp.allclose(outb.astype(jnp.float32), refb.astype(jnp.float32)), \
        "mismatch vs reference clamp (bf16)"

    # Awkward size with no 128-multiple factorization (exercises the pad fallback).
    xc = jax.random.normal(jax.random.PRNGKey(2), (3, 5, 7), dtype=jnp.float32) * 3.0
    outc = jax.block_until_ready(tlu(xc, threshold))
    refc = jnp.clip(xc, -threshold, threshold)
    assert outc.shape == xc.shape
    assert jnp.allclose(outc, refc), "mismatch vs reference clamp (padded path)"

    print("KERNEL_OK")
</pallas_src>

<mosaic_0001>
module attributes {stable_mosaic.version = 11 : i64} {
  func.func @_tlu_kernel(%arg0: i32, %arg1: memref<1xf32, #tpu.memory_space<smem>>, %arg2: memref<4x512xf32, #tpu.memory_space<vmem>>, %arg3: memref<4x512xf32, #tpu.memory_space<vmem>>) attributes {dimension_semantics = [#tpu.dimension_semantics<parallel>], iteration_bounds = array<i64: 1>, scalar_prefetch = 1 : i64, scratch_operands = 0 : i64, tpu.core_type = #tpu.core_type<tc>, window_params = [{transform_indices = @transform_0, window_bounds = array<i64: 4, 512>}, {transform_indices = @transform_1, window_bounds = array<i64: 4, 512>}]} {
    %c0 = arith.constant 0 : index
    %c0_0 = arith.constant 0 : index
    %0 = vector.load %arg2[%c0, %c0_0] : memref<4x512xf32, #tpu.memory_space<vmem>>, vector<4x512xf32>
    %c0_1 = arith.constant 0 : index
    %1 = memref.load %arg1[%c0_1] : memref<1xf32, #tpu.memory_space<smem>>
    %cst = arith.constant 0.000000e+00 : f32
    %2 = arith.subf %cst, %1 : f32
    %3 = vector.broadcast %2 : f32 to vector<4x512xf32>
    %4 = arith.maximumf %0, %3 : vector<4x512xf32>
    %5 = vector.broadcast %1 : f32 to vector<4x512xf32>
    %6 = arith.minimumf %4, %5 : vector<4x512xf32>
    %c0_2 = arith.constant 0 : index
    %c0_3 = arith.constant 0 : index
    %7 = vector.load %arg3[%c0_2, %c0_3] : memref<4x512xf32, #tpu.memory_space<vmem>>, vector<4x512xf32>
    tpu.vector_store %arg3[%c0_2, %c0_3], %6 {strides = array<i32>} : memref<4x512xf32, #tpu.memory_space<vmem>>, vector<4x512xf32>,
    return
  }
  func.func @transform_0(%arg0: i32, %arg1: memref<1xf32, #tpu.memory_space<smem>>) -> (i32, i32) {
    %c0_i32 = arith.constant 0 : i32
    %c0_i32_0 = arith.constant 0 : i32
    return %arg0, %c0_i32 : i32, i32
  }
  func.func @transform_1(%arg0: i32, %arg1: memref<1xf32, #tpu.memory_space<smem>>) -> (i32, i32) {
    %c0_i32 = arith.constant 0 : i32
    %c0_i32_0 = arith.constant 0 : i32
    return %arg0, %c0_i32 : i32, i32
  }
}

</mosaic_0001>

<llo_original>
// kernel: tpu_custom_call.1
$region0: #{tpu_custom_call.1}
  #allocation0 [shape = 'u32[]', space=smem, size = 0x4, offset = 0x4, fixed_abs, tag = 'smem constant byte address 0x4 - core index']
  #allocation1 [shape = 'u32[144,128]{1,0:T(1,128)}', space=vmem, size = 0x12000, scoped, tag = 'internal scratch']
  #allocation2 [shape = 's32[1]{0}', space=sflag, size = 0x4, scoped, tag = 'scoped memory for tpu_custom_call.1']
  #allocation3 [shape = 'f32[1]{0:T(128)S(6)}', space=smem, size = 0x200, scoped, tag = 'prefetched SMEM operand 0']
  %s0 = inlined_call_operand.<no memory space> [shape: f32[1], index: 0, kind: input, shape index: {}]
  %s1 = inlined_call_operand.hbm [shape: f32[4,512], index: 1, kind: input, shape index: {}]
  %s2 = inlined_call_operand.hbm [shape: f32[4,512], index: 2, kind: output, shape index: {}]
  %s3 = sld [smem:[#allocation0]]
  $region18: #{tpu_custom_call.1} parent=0
    _
  %s5 = ssub.s32 1, %s3
  %s6 = scalar_select 0, %s5, %s3
  %7 = sst [smem:[#allocation3]] %s0
  $region1: #{tpu_custom_call.1} parent=0
    #allocation4 [shape = 'u8[8192]{0}', space=vmem, size = 0x2000, scoped, tag = 'input window, operand 1, single buffered']
    #allocation5 [shape = 's32[1]{0}', space=sflag, size = 0x4, scoped, tag = 'scoped memory for tpu_custom_call.1']
    #allocation6 [shape = 's32[1]{0}', space=sflag, size = 0x4, scoped, tag = 'scoped memory for tpu_custom_call.1']
    #allocation7 [shape = 'u8[8192]{0}', space=vmem, size = 0x2000, scoped, tag = 'output window, operand 0, single buffered']
    %8 = vsyncpa [#allocation5], 0
    %9 = vsyncpa [#allocation6], 0
    // Predicated region
    $region2: #{tpu_custom_call.1} parent=1 // pred_check
      _
    $region3: #{tpu_custom_call.1} parent=1 // pred_check_branch
      %11 = sbr.rel (0) target = $region5
    $region4: #{tpu_custom_call.1} parent=1 // pred_region
      %s13 = ssub.s32 256, 256
      %14 = vsyncadd [#allocation5], %s13
      %s16 = sshll.u32 [#allocation4], 4
      %s17 = int_to_ptr.vmem [resolvable:$true] %s16
      %19 = dma.hbm_to_vmem [thread:$0]  %s1, 256, %s17, [#allocation5]
    $region5: #{tpu_custom_call.1} parent=1 // pred_fallthru
      _
    // Predicated region
    $region6: #{tpu_custom_call.1} parent=1 // pred_check
      _
    $region7: #{tpu_custom_call.1} parent=1 // pred_check_branch
      %21 = sbr.rel (0) target = $region9
    $region8: #{tpu_custom_call.1} parent=1 // pred_region
      %22 = dma.done [#allocation5], 256
    $region9: #{tpu_custom_call.1} parent=1 // pred_fallthru
      _
    %v23 = vld [vmem:[#allocation4] sm:$0xff]
    %v24 = vld [vmem:[#allocation4 + $0x8] sm:$0xff]
    %s25 = sld [smem:[#allocation3]]
    %s26 = ssub.f32 0.0, %s25
    %v27 = vstv %s26
    %v28 = vmax.f32 %v23, %v27
    %v29 = vmax.f32 %v24, %v27
    %v30 = vstv %s25
    %v31 = vmin.f32 %v28, %v30
    %v32 = vmin.f32 %v29, %v30
    %33 = vst [vmem:[#allocation7] sm:$0xff] %v31
    %34 = vst [vmem:[#allocation7 + $0x8] sm:$0xff] %v32
    // Predicated region
    $region10: #{tpu_custom_call.1} parent=1 // pred_check
      _
    $region11: #{tpu_custom_call.1} parent=1 // pred_check_branch
      %36 = sbr.rel (0) target = $region13
    $region12: #{tpu_custom_call.1} parent=1 // pred_region
      %s38 = ssub.s32 256, 256
      %39 = vsyncadd [#allocation6], %s38
      %s41 = sshll.u32 [#allocation7], 4
      %s42 = int_to_ptr.vmem [resolvable:$true] %s41
      %44 = dma.vmem_to_hbm [thread:$0]  %s42, 256, %s2, [#allocation6]
    $region13: #{tpu_custom_call.1} parent=1 // pred_fallthru
      _
    // Predicated region
    $region14: #{tpu_custom_call.1} parent=1 // pred_check
      _
    $region15: #{tpu_custom_call.1} parent=1 // pred_check_branch
      %46 = sbr.rel (0) target = $region17
    $region16: #{tpu_custom_call.1} parent=1 // pred_region
      %47 = dma.done [#allocation6], 256
    $region17: #{tpu_custom_call.1} parent=1 // pred_fallthru
      _
    %48 = vsyncpa [#allocation5], 1
    %49 = vsyncpa [#allocation6], 1

</llo_original>
